<compile_context>
chip_gen: v7x
topology: tpu7x:2x2x1
jax: 0.10.0
libtpu: 0.0.40
codegen_flags: <defaults>
</compile_context>

<pallas_src>
import functools

import jax
import jax.numpy as jnp
from jax.experimental import pallas as pl
from jax.experimental.pallas import tpu as pltpu

# Layer sizes of the PyTorch module.
DIMS = [128, 64, 32, 16, 8, 4, 2]

# Large row tile: 8192 x 128 x 4 B = 4 MiB per x buffer (8 MiB double-buffered
# in f32, 4 MiB in bf16) -- comfortably inside every generation's scoped VMEM,
# and >10x the per-step pipeline overhead in HBM work.
DEFAULT_TILE_B = 8192


def _round_up(n, m):
    return ((n + m - 1) // m) * m


def _choose_tile_b(batch, tile_b):
    """Pick a legal, well-aligned row tile.

    * aligned to 16 rows (bf16 sublane packing) when the batch allows,
      otherwise to 8 (minimum legal sublane multiple),
    * clamped to the batch so tiny test batches still compile,
    * split so the grid has >= 2 steps when the batch is large enough, so
      dimension_semantics=("parallel",) actually shards rows across the two
      TensorCores on v7x.
    """
    align = 16 if batch >= 16 else 8
    t = min(tile_b, _round_up(batch, align))
    t = max(align, (t // align) * align)
    if batch > 2 * align and pl.cdiv(batch, t) < 2:
        t = max(align, _round_up(pl.cdiv(batch, 2), align))
    return t


def mlp_kernel(x_ref,
               w1_ref, b1_ref,
               w2_ref, b2_ref,
               w3_ref, b3_ref,
               w4_ref, b4_ref,
               w5_ref, b5_ref,
               w6_ref, b6_ref,
               o_ref):
    """Fused forward pass for one row tile: 6 matmuls + 5 ReLUs, all in VMEM."""
    h = x_ref[...]
    ws = (w1_ref, w2_ref, w3_ref, w4_ref, w5_ref, w6_ref)
    bs = (b1_ref, b2_ref, b3_ref, b4_ref, b5_ref, b6_ref)
    n_layers = len(ws)
    for i in range(n_layers):
        w = ws[i][...]
        # Cast to the compute dtype *inside* the kernel (tile already in VMEM);
        # MXU matmul accumulates in f32 regardless of the input dtype.
        h = jnp.dot(h.astype(w.dtype), w,
                    preferred_element_type=jnp.float32) + bs[i][...]
        if i < n_layers - 1:  # ReLU after every Linear except the last
            h = jnp.maximum(h, 0.0)
    o_ref[...] = h.astype(o_ref.dtype)


@functools.partial(
    jax.jit, static_argnames=("tile_b", "compute_dtype", "vmem_limit_bytes"))
def mlp_forward(x, params, *, tile_b=DEFAULT_TILE_B,
                compute_dtype=jnp.bfloat16, vmem_limit_bytes=None):
    """x: (B, 128). params: list of (W (in,out), b (1,out)) pairs.

    compute_dtype: dtype used for x and W inside the kernel (bf16 default).
    Biases and accumulation stay f32; output is f32.  x is NOT cast at the
    call boundary -- pass bf16 x from the producer to halve its HBM stream.
    For very large f32 tiles on v5e, pass vmem_limit_bytes (e.g. 48 << 20).
    """
    B, d_in = x.shape
    assert d_in == DIMS[0], x.shape
    assert len(params) == len(DIMS) - 1

    tile = _choose_tile_b(B, tile_b)
    grid = (pl.cdiv(B, tile),)

    # x tile marches with the grid (double-buffered by the Pallas pipeline).
    in_specs = [pl.BlockSpec((tile, DIMS[0]), lambda i: (i, 0))]
    flat = []
    for w, b in params:
        flat.append(w.astype(compute_dtype))   # ~44 KB total, resident in VMEM
        flat.append(b.astype(jnp.float32))     # bias / accumulation stay f32
        # Constant block index -> fetched once, resident across the grid.
        in_specs.append(pl.BlockSpec(w.shape, lambda i: (0, 0)))
        in_specs.append(pl.BlockSpec(b.shape, lambda i: (0, 0)))

    out_shape = jax.ShapeDtypeStruct((B, DIMS[-1]), jnp.float32)
    out_spec = pl.BlockSpec((tile, DIMS[-1]), lambda i: (i, 0))

    return pl.pallas_call(
        mlp_kernel,
        out_shape=out_shape,
        grid=grid,
        in_specs=in_specs,
        out_specs=out_spec,
        compiler_params=pltpu.CompilerParams(
            # Rows are independent: shard the batch axis across TensorCores
            # (2x on v7x; harmless no-op on v5e/v6e).
            dimension_semantics=("parallel",),
            vmem_limit_bytes=vmem_limit_bytes,
        ),
    )(x, *flat)


def init_params(key):
    """Deterministic init mimicking PyTorch Linear default (+/- 1/sqrt(fan_in))."""
    params = []
    for i in range(len(DIMS) - 1):
        fan_in, fan_out = DIMS[i], DIMS[i + 1]
        key, kw, kb = jax.random.split(key, 3)
        bound = 1.0 / (fan_in ** 0.5)
        w = jax.random.uniform(kw, (fan_in, fan_out), jnp.float32, -bound, bound)
        b = jax.random.uniform(kb, (1, fan_out), jnp.float32, -bound, bound)
        params.append((w, b))
    return params


def mlp_reference(x, params):
    """Pure-JAX reference for correctness checking."""
    h = x
    for i, (w, b) in enumerate(params):
        h = h @ w + b
        if i < len(params) - 1:
            h = jnp.maximum(h, 0.0)
    return h


if __name__ == "__main__":
    key = jax.random.PRNGKey(0)
    key, kx_small, kx_big = jax.random.split(key, 3)
    params = init_params(key)

    # --- small batch, single partial tile, exact f32 compute ---------------
    B_small = 8
    x_small = jax.random.normal(kx_small, (B_small, DIMS[0]), jnp.float32)
    out_small = jax.block_until_ready(
        mlp_forward(x_small, params, compute_dtype=jnp.float32))
    ref_small = mlp_reference(x_small, params)
    assert out_small.shape == (B_small, DIMS[-1]), out_small.shape
    assert jnp.allclose(out_small, ref_small, atol=1e-5, rtol=1e-5), \
        "small-batch mismatch vs reference"

    # --- multi-tile batch: exercises the pipelined, megacore-split grid ----
    B_big = 256
    x_big = jax.random.normal(kx_big, (B_big, DIMS[0]), jnp.float32)
    out_big = jax.block_until_ready(
        mlp_forward(x_big, params, tile_b=64, compute_dtype=jnp.float32))
    ref_big = mlp_reference(x_big, params)
    assert out_big.shape == (B_big, DIMS[-1]), out_big.shape
    assert jnp.allclose(out_big, ref_big, atol=1e-5, rtol=1e-5), \
        "multi-tile mismatch vs reference"

    # --- default bf16 compute path with bf16 x from the producer -----------
    # (this is the configuration that actually halves the x HBM stream)
    out_bf16 = jax.block_until_ready(
        mlp_forward(x_big.astype(jnp.bfloat16), params))
    assert out_bf16.shape == (B_big, DIMS[-1]), out_bf16.shape
    assert jnp.allclose(out_bf16, ref_big, atol=5e-2, rtol=5e-2), \
        "bf16 path diverged beyond expected quantization error"

    print("KERNEL_OK")
</pallas_src>

<mosaic_0001>
module attributes {stable_mosaic.version = 11 : i64} {
  func.func @mlp_kernel(%arg0: i32, %arg1: memref<8x128xf32, #tpu.memory_space<vmem>>, %arg2: memref<128x64xf32, #tpu.memory_space<vmem>>, %arg3: memref<1x64xf32, #tpu.memory_space<vmem>>, %arg4: memref<64x32xf32, #tpu.memory_space<vmem>>, %arg5: memref<1x32xf32, #tpu.memory_space<vmem>>, %arg6: memref<32x16xf32, #tpu.memory_space<vmem>>, %arg7: memref<1x16xf32, #tpu.memory_space<vmem>>, %arg8: memref<16x8xf32, #tpu.memory_space<vmem>>, %arg9: memref<1x8xf32, #tpu.memory_space<vmem>>, %arg10: memref<8x4xf32, #tpu.memory_space<vmem>>, %arg11: memref<1x4xf32, #tpu.memory_space<vmem>>, %arg12: memref<4x2xf32, #tpu.memory_space<vmem>>, %arg13: memref<1x2xf32, #tpu.memory_space<vmem>>, %arg14: memref<8x2xf32, #tpu.memory_space<vmem>>) attributes {dimension_semantics = [#tpu.dimension_semantics<parallel>], iteration_bounds = array<i64: 1>, scalar_prefetch = 0 : i64, scratch_operands = 0 : i64, tpu.core_type = #tpu.core_type<tc>, window_params = [{transform_indices = @transform_0, window_bounds = array<i64: 8, 128>}, {pipeline_mode = #tpu.pipeline_mode<synchronous>, transform_indices = @transform_1, window_bounds = array<i64: 128, 64>}, {pipeline_mode = #tpu.pipeline_mode<synchronous>, transform_indices = @transform_2, window_bounds = array<i64: 1, 64>}, {pipeline_mode = #tpu.pipeline_mode<synchronous>, transform_indices = @transform_3, window_bounds = array<i64: 64, 32>}, {pipeline_mode = #tpu.pipeline_mode<synchronous>, transform_indices = @transform_4, window_bounds = array<i64: 1, 32>}, {pipeline_mode = #tpu.pipeline_mode<synchronous>, transform_indices = @transform_5, window_bounds = array<i64: 32, 16>}, {pipeline_mode = #tpu.pipeline_mode<synchronous>, transform_indices = @transform_6, window_bounds = array<i64: 1, 16>}, {pipeline_mode = #tpu.pipeline_mode<synchronous>, transform_indices = @transform_7, window_bounds = array<i64: 16, 8>}, {pipeline_mode = #tpu.pipeline_mode<synchronous>, transform_indices = @transform_8, window_bounds = array<i64: 1, 8>}, {pipeline_mode = #tpu.pipeline_mode<synchronous>, transform_indices = @transform_9, window_bounds = array<i64: 8, 4>}, {pipeline_mode = #tpu.pipeline_mode<synchronous>, transform_indices = @transform_10, window_bounds = array<i64: 1, 4>}, {pipeline_mode = #tpu.pipeline_mode<synchronous>, transform_indices = @transform_11, window_bounds = array<i64: 4, 2>}, {pipeline_mode = #tpu.pipeline_mode<synchronous>, transform_indices = @transform_12, window_bounds = array<i64: 1, 2>}, {transform_indices = @transform_13, window_bounds = array<i64: 8, 2>}]} {
    %c0 = arith.constant 0 : index
    %c0_0 = arith.constant 0 : index
    %0 = vector.load %arg1[%c0, %c0_0] : memref<8x128xf32, #tpu.memory_space<vmem>>, vector<8x128xf32>
    %c0_1 = arith.constant 0 : index
    %c0_2 = arith.constant 0 : index
    %1 = vector.load %arg2[%c0_1, %c0_2] : memref<128x64xf32, #tpu.memory_space<vmem>>, vector<128x64xf32>
    %cst = arith.constant dense<0.000000e+00> : vector<8x64xf32>
    %2 = tpu.matmul %0, %1, %cst {dimension_numbers = #tpu.dot_dimension_numbers<[1], [0], [0], [1], [0, 0, 1, 1], [], []>} : vector<8x128xf32>, vector<128x64xf32>, vector<8x64xf32> -> vector<8x64xf32>
    %c0_3 = arith.constant 0 : index
    %c0_4 = arith.constant 0 : index
    %3 = vector.load %arg3[%c0_3, %c0_4] : memref<1x64xf32, #tpu.memory_space<vmem>>, vector<1x64xf32>
    %4 = vector.broadcast %3 : vector<1x64xf32> to vector<8x64xf32>
    %5 = arith.addf %2, %4 : vector<8x64xf32>
    %cst_5 = arith.constant 0.000000e+00 : f32
    %6 = vector.broadcast %cst_5 : f32 to vector<8x64xf32>
    %7 = arith.maximumf %5, %6 : vector<8x64xf32>
    %c0_6 = arith.constant 0 : index
    %c0_7 = arith.constant 0 : index
    %8 = vector.load %arg4[%c0_6, %c0_7] : memref<64x32xf32, #tpu.memory_space<vmem>>, vector<64x32xf32>
    %cst_8 = arith.constant dense<0.000000e+00> : vector<8x32xf32>
    %9 = tpu.matmul %7, %8, %cst_8 {dimension_numbers = #tpu.dot_dimension_numbers<[1], [0], [0], [1], [0, 0, 1, 1], [], []>} : vector<8x64xf32>, vector<64x32xf32>, vector<8x32xf32> -> vector<8x32xf32>
    %c0_9 = arith.constant 0 : index
    %c0_10 = arith.constant 0 : index
    %10 = vector.load %arg5[%c0_9, %c0_10] : memref<1x32xf32, #tpu.memory_space<vmem>>, vector<1x32xf32>
    %11 = vector.broadcast %10 : vector<1x32xf32> to vector<8x32xf32>
    %12 = arith.addf %9, %11 : vector<8x32xf32>
    %cst_11 = arith.constant 0.000000e+00 : f32
    %13 = vector.broadcast %cst_11 : f32 to vector<8x32xf32>
    %14 = arith.maximumf %12, %13 : vector<8x32xf32>
    %c0_12 = arith.constant 0 : index
    %c0_13 = arith.constant 0 : index
    %15 = vector.load %arg6[%c0_12, %c0_13] : memref<32x16xf32, #tpu.memory_space<vmem>>, vector<32x16xf32>
    %cst_14 = arith.constant dense<0.000000e+00> : vector<8x16xf32>
    %16 = tpu.matmul %14, %15, %cst_14 {dimension_numbers = #tpu.dot_dimension_numbers<[1], [0], [0], [1], [0, 0, 1, 1], [], []>} : vector<8x32xf32>, vector<32x16xf32>, vector<8x16xf32> -> vector<8x16xf32>
    %c0_15 = arith.constant 0 : index
    %c0_16 = arith.constant 0 : index
    %17 = vector.load %arg7[%c0_15, %c0_16] : memref<1x16xf32, #tpu.memory_space<vmem>>, vector<1x16xf32>
    %18 = vector.broadcast %17 : vector<1x16xf32> to vector<8x16xf32>
    %19 = arith.addf %16, %18 : vector<8x16xf32>
    %cst_17 = arith.constant 0.000000e+00 : f32
    %20 = vector.broadcast %cst_17 : f32 to vector<8x16xf32>
    %21 = arith.maximumf %19, %20 : vector<8x16xf32>
    %c0_18 = arith.constant 0 : index
    %c0_19 = arith.constant 0 : index
    %22 = vector.load %arg8[%c0_18, %c0_19] : memref<16x8xf32, #tpu.memory_space<vmem>>, vector<16x8xf32>
    %cst_20 = arith.constant dense<0.000000e+00> : vector<8x8xf32>
    %23 = tpu.matmul %21, %22, %cst_20 {dimension_numbers = #tpu.dot_dimension_numbers<[1], [0], [0], [1], [0, 0, 1, 1], [], []>} : vector<8x16xf32>, vector<16x8xf32>, vector<8x8xf32> -> vector<8x8xf32>
    %c0_21 = arith.constant 0 : index
    %c0_22 = arith.constant 0 : index
    %24 = vector.load %arg9[%c0_21, %c0_22] : memref<1x8xf32, #tpu.memory_space<vmem>>, vector<1x8xf32>
    %25 = vector.broadcast %24 : vector<1x8xf32> to vector<8x8xf32>
    %26 = arith.addf %23, %25 : vector<8x8xf32>
    %cst_23 = arith.constant 0.000000e+00 : f32
    %27 = vector.broadcast %cst_23 : f32 to vector<8x8xf32>
    %28 = arith.maximumf %26, %27 : vector<8x8xf32>
    %c0_24 = arith.constant 0 : index
    %c0_25 = arith.constant 0 : index
    %29 = vector.load %arg10[%c0_24, %c0_25] : memref<8x4xf32, #tpu.memory_space<vmem>>, vector<8x4xf32>
    %cst_26 = arith.constant dense<0.000000e+00> : vector<8x4xf32>
    %30 = tpu.matmul %28, %29, %cst_26 {dimension_numbers = #tpu.dot_dimension_numbers<[1], [0], [0], [1], [0, 0, 1, 1], [], []>} : vector<8x8xf32>, vector<8x4xf32>, vector<8x4xf32> -> vector<8x4xf32>
    %c0_27 = arith.constant 0 : index
    %c0_28 = arith.constant 0 : index
    %31 = vector.load %arg11[%c0_27, %c0_28] : memref<1x4xf32, #tpu.memory_space<vmem>>, vector<1x4xf32>
    %32 = vector.broadcast %31 : vector<1x4xf32> to vector<8x4xf32>
    %33 = arith.addf %30, %32 : vector<8x4xf32>
    %cst_29 = arith.constant 0.000000e+00 : f32
    %34 = vector.broadcast %cst_29 : f32 to vector<8x4xf32>
    %35 = arith.maximumf %33, %34 : vector<8x4xf32>
    %c0_30 = arith.constant 0 : index
    %c0_31 = arith.constant 0 : index
    %36 = vector.load %arg12[%c0_30, %c0_31] : memref<4x2xf32, #tpu.memory_space<vmem>>, vector<4x2xf32>
    %cst_32 = arith.constant dense<0.000000e+00> : vector<8x2xf32>
    %37 = tpu.matmul %35, %36, %cst_32 {dimension_numbers = #tpu.dot_dimension_numbers<[1], [0], [0], [1], [0, 0, 1, 1], [], []>} : vector<8x4xf32>, vector<4x2xf32>, vector<8x2xf32> -> vector<8x2xf32>
    %c0_33 = arith.constant 0 : index
    %c0_34 = arith.constant 0 : index
    %38 = vector.load %arg13[%c0_33, %c0_34] : memref<1x2xf32, #tpu.memory_space<vmem>>, vector<1x2xf32>
    %39 = vector.broadcast %38 : vector<1x2xf32> to vector<8x2xf32>
    %40 = arith.addf %37, %39 : vector<8x2xf32>
    %c0_35 = arith.constant 0 : index
    %c0_36 = arith.constant 0 : index
    %41 = vector.load %arg14[%c0_35, %c0_36] : memref<8x2xf32, #tpu.memory_space<vmem>>, vector<8x2xf32>
    tpu.vector_store %arg14[%c0_35, %c0_36], %40 {strides = array<i32>} : memref<8x2xf32, #tpu.memory_space<vmem>>, vector<8x2xf32>,
    return
  }
  func.func @transform_0(%arg0: i32) -> (i32, i32) {
    %c0_i32 = arith.constant 0 : i32
    %c0_i32_0 = arith.constant 0 : i32
    return %arg0, %c0_i32 : i32, i32
  }
  func.func @transform_1(%arg0: i32) -> (i32, i32) {
    %c0_i32 = arith.constant 0 : i32
    %c0_i32_0 = arith.constant 0 : i32
    %c0_i32_1 = arith.constant 0 : i32
    return %c0_i32, %c0_i32_0 : i32, i32
  }
  func.func @transform_2(%arg0: i32) -> (i32, i32) {
    %c0_i32 = arith.constant 0 : i32
    %c0_i32_0 = arith.constant 0 : i32
    %c0_i32_1 = arith.constant 0 : i32
    return %c0_i32, %c0_i32_0 : i32, i32
  }
  func.func @transform_3(%arg0: i32) -> (i32, i32) {
    %c0_i32 = arith.constant 0 : i32
    %c0_i32_0 = arith.constant 0 : i32
    %c0_i32_1 = arith.constant 0 : i32
    return %c0_i32, %c0_i32_0 : i32, i32
  }
  func.func @transform_4(%arg0: i32) -> (i32, i32) {
    %c0_i32 = arith.constant 0 : i32
    %c0_i32_0 = arith.constant 0 : i32
    %c0_i32_1 = arith.constant 0 : i32
    return %c0_i32, %c0_i32_0 : i32, i32
  }
  func.func @transform_5(%arg0: i32) -> (i32, i32) {
    %c0_i32 = arith.constant 0 : i32
    %c0_i32_0 = arith.constant 0 : i32
    %c0_i32_1 = arith.constant 0 : i32
    return %c0_i32, %c0_i32_0 : i32, i32
  }
  func.func @transform_6(%arg0: i32) -> (i32, i32) {
    %c0_i32 = arith.constant 0 : i32
    %c0_i32_0 = arith.constant 0 : i32
    %c0_i32_1 = arith.constant 0 : i32
    return %c0_i32, %c0_i32_0 : i32, i32
  }
  func.func @transform_7(%arg0: i32) -> (i32, i32) {
    %c0_i32 = arith.constant 0 : i32
    %c0_i32_0 = arith.constant 0 : i32
    %c0_i32_1 = arith.constant 0 : i32
    return %c0_i32, %c0_i32_0 : i32, i32
  }
  func.func @transform_8(%arg0: i32) -> (i32, i32) {
    %c0_i32 = arith.constant 0 : i32
    %c0_i32_0 = arith.constant 0 : i32
    %c0_i32_1 = arith.constant 0 : i32
    return %c0_i32, %c0_i32_0 : i32, i32
  }
  func.func @transform_9(%arg0: i32) -> (i32, i32) {
    %c0_i32 = arith.constant 0 : i32
    %c0_i32_0 = arith.constant 0 : i32
    %c0_i32_1 = arith.constant 0 : i32
    return %c0_i32, %c0_i32_0 : i32, i32
  }
  func.func @transform_10(%arg0: i32) -> (i32, i32) {
    %c0_i32 = arith.constant 0 : i32
    %c0_i32_0 = arith.constant 0 : i32
    %c0_i32_1 = arith.constant 0 : i32
    return %c0_i32, %c0_i32_0 : i32, i32
  }
  func.func @transform_11(%arg0: i32) -> (i32, i32) {
    %c0_i32 = arith.constant 0 : i32
    %c0_i32_0 = arith.constant 0 : i32
    %c0_i32_1 = arith.constant 0 : i32
    return %c0_i32, %c0_i32_0 : i32, i32
  }
  func.func @transform_12(%arg0: i32) -> (i32, i32) {
    %c0_i32 = arith.constant 0 : i32
    %c0_i32_0 = arith.constant 0 : i32
    %c0_i32_1 = arith.constant 0 : i32
    return %c0_i32, %c0_i32_0 : i32, i32
  }
  func.func @transform_13(%arg0: i32) -> (i32, i32) {
    %c0_i32 = arith.constant 0 : i32
    %c0_i32_0 = arith.constant 0 : i32
    return %arg0, %c0_i32 : i32, i32
  }
}

</mosaic_0001>

<llo_original>
// kernel: mlp_forward.1
$region0: #{mlp_forward.1}
  #allocation0 [shape = 'u32[]', space=smem, size = 0x4, offset = 0x4, fixed_abs, tag = 'smem constant byte address 0x4 - core index']
  #allocation1 [shape = 'u32[144,128]{1,0:T(1,128)}', space=vmem, size = 0x12000, scoped, tag = 'internal scratch']
  %s0 = inlined_call_operand.vmem [shape: f32[8,128], index: 0, kind: input, shape index: {}]
  %s1 = inlined_call_operand.vmem [shape: f32[128,64], index: 1, kind: input, shape index: {}]
  %s2 = inlined_call_operand.vmem [shape: f32[1,64], index: 2, kind: input, shape index: {}]
  %s3 = inlined_call_operand.vmem [shape: f32[64,32], index: 3, kind: input, shape index: {}]
  %s4 = inlined_call_operand.vmem [shape: f32[1,32], index: 4, kind: input, shape index: {}]
  %s5 = inlined_call_operand.vmem [shape: f32[32,16], index: 5, kind: input, shape index: {}]
  %s6 = inlined_call_operand.vmem [shape: f32[1,16], index: 6, kind: input, shape index: {}]
  %s7 = inlined_call_operand.vmem [shape: f32[16,8], index: 7, kind: input, shape index: {}]
  %s8 = inlined_call_operand.vmem [shape: f32[1,8], index: 8, kind: input, shape index: {}]
  %s9 = inlined_call_operand.vmem [shape: f32[8,4], index: 9, kind: input, shape index: {}]
  %s10 = inlined_call_operand.vmem [shape: f32[1,4], index: 10, kind: input, shape index: {}]
  %s11 = inlined_call_operand.vmem [shape: f32[4,2], index: 11, kind: input, shape index: {}]
  %s12 = inlined_call_operand.vmem [shape: f32[1,2], index: 12, kind: input, shape index: {}]
  %s13 = inlined_call_operand.vmem [shape: f32[8,2], index: 13, kind: output, shape index: {}]
  %s14 = sld [smem:[#allocation0]]
  $region62: #{mlp_forward.1} parent=0
    _
  %s16 = ssub.s32 1, %s14
  %s17 = scalar_select 0, %s16, %s14
  // Predicated region
  $region2: #{mlp_forward.1} parent=0 // pred_check
    _
  $region3: #{mlp_forward.1} parent=0 // pred_check_branch
    %19 = sbr.rel (0) target = $region5
  $region4: #{mlp_forward.1} parent=0 // pred_region
    _
  $region5: #{mlp_forward.1} parent=0 // pred_fallthru
    _
  // Predicated region
  $region6: #{mlp_forward.1} parent=0 // pred_check
    _
  $region7: #{mlp_forward.1} parent=0 // pred_check_branch
    %21 = sbr.rel (0) target = $region9
  $region8: #{mlp_forward.1} parent=0 // pred_region
    _
  $region9: #{mlp_forward.1} parent=0 // pred_fallthru
    _
  // Predicated region
  $region10: #{mlp_forward.1} parent=0 // pred_check
    _
  $region11: #{mlp_forward.1} parent=0 // pred_check_branch
    %23 = sbr.rel (0) target = $region13
  $region12: #{mlp_forward.1} parent=0 // pred_region
    _
  $region13: #{mlp_forward.1} parent=0 // pred_fallthru
    _
  // Predicated region
  $region14: #{mlp_forward.1} parent=0 // pred_check
    _
  $region15: #{mlp_forward.1} parent=0 // pred_check_branch
    %25 = sbr.rel (0) target = $region17
  $region16: #{mlp_forward.1} parent=0 // pred_region
    _
  $region17: #{mlp_forward.1} parent=0 // pred_fallthru
    _
  // Predicated region
  $region18: #{mlp_forward.1} parent=0 // pred_check
    _
  $region19: #{mlp_forward.1} parent=0 // pred_check_branch
    %27 = sbr.rel (0) target = $region21
  $region20: #{mlp_forward.1} parent=0 // pred_region
    _
  $region21: #{mlp_forward.1} parent=0 // pred_fallthru
    _
  // Predicated region
  $region22: #{mlp_forward.1} parent=0 // pred_check
    _
  $region23: #{mlp_forward.1} parent=0 // pred_check_branch
    %29 = sbr.rel (0) target = $region25
  $region24: #{mlp_forward.1} parent=0 // pred_region
    _
  $region25: #{mlp_forward.1} parent=0 // pred_fallthru
    _
  // Predicated region
  $region26: #{mlp_forward.1} parent=0 // pred_check
    _
  $region27: #{mlp_forward.1} parent=0 // pred_check_branch
    %31 = sbr.rel (0) target = $region29
  $region28: #{mlp_forward.1} parent=0 // pred_region
    _
  $region29: #{mlp_forward.1} parent=0 // pred_fallthru
    _
  // Predicated region
  $region30: #{mlp_forward.1} parent=0 // pred_check
    _
  $region31: #{mlp_forward.1} parent=0 // pred_check_branch
    %33 = sbr.rel (0) target = $region33
  $region32: #{mlp_forward.1} parent=0 // pred_region
    _
  $region33: #{mlp_forward.1} parent=0 // pred_fallthru
    _
  // Predicated region
  $region34: #{mlp_forward.1} parent=0 // pred_check
    _
  $region35: #{mlp_forward.1} parent=0 // pred_check_branch
    %35 = sbr.rel (0) target = $region37
  $region36: #{mlp_forward.1} parent=0 // pred_region
    _
  $region37: #{mlp_forward.1} parent=0 // pred_fallthru
    _
  // Predicated region
  $region38: #{mlp_forward.1} parent=0 // pred_check
    _
  $region39: #{mlp_forward.1} parent=0 // pred_check_branch
    %37 = sbr.rel (0) target = $region41
  $region40: #{mlp_forward.1} parent=0 // pred_region
    _
  $region41: #{mlp_forward.1} parent=0 // pred_fallthru
    _
  // Predicated region
  $region42: #{mlp_forward.1} parent=0 // pred_check
    _
  $region43: #{mlp_forward.1} parent=0 // pred_check_branch
    %39 = sbr.rel (0) target = $region45
  $region44: #{mlp_forward.1} parent=0 // pred_region
    _
  $region45: #{mlp_forward.1} parent=0 // pred_fallthru
    _
  // Predicated region
  $region46: #{mlp_forward.1} parent=0 // pred_check
    _
  $region47: #{mlp_forward.1} parent=0 // pred_check_branch
    %41 = sbr.rel (0) target = $region49
  $region48: #{mlp_forward.1} parent=0 // pred_region
    _
  $region49: #{mlp_forward.1} parent=0 // pred_fallthru
    _
  // Predicated region
  $region50: #{mlp_forward.1} parent=0 // pred_check
    _
  $region51: #{mlp_forward.1} parent=0 // pred_check_branch
    %43 = sbr.rel (0) target = $region53
  $region52: #{mlp_forward.1} parent=0 // pred_region
    _
  $region53: #{mlp_forward.1} parent=0 // pred_fallthru
    _
  %v44 = vld [vmem:[%s0] sm:$0xff]
  %v45 = vld [vmem:[%s1] sm:$0xff]
  %v46 = vld [vmem:[%s1 + $0x8] sm:$0xff]
  %v47 = vld [vmem:[%s1 + $0x10] sm:$0xff]
  %v48 = vld [vmem:[%s1 + $0x18] sm:$0xff]
  %v49 = vld [vmem:[%s1 + $0x20] sm:$0xff]
  %v50 = vld [vmem:[%s1 + $0x28] sm:$0xff]
  %v51 = vld [vmem:[%s1 + $0x30] sm:$0xff]
  %v52 = vld [vmem:[%s1 + $0x38] sm:$0xff]
  %v53 = vld [vmem:[%s1 + $0x40] sm:$0xff]
  %v54 = vld [vmem:[%s1 + $0x48] sm:$0xff]
  %v55 = vld [vmem:[%s1 + $0x50] sm:$0xff]
  %v56 = vld [vmem:[%s1 + $0x58] sm:$0xff]
  %v57 = vld [vmem:[%s1 + $0x60] sm:$0xff]
  %v58 = vld [vmem:[%s1 + $0x68] sm:$0xff]
  %v59 = vld [vmem:[%s1 + $0x70] sm:$0xff]
  %v60 = vld [vmem:[%s1 + $0x78] sm:$0xff]
  %v61 = vld [vmem:[%s2] sm:$0x1]
  %v63 = vlaneseq
  %v64 = vshrl.u32 %v63, 7
  %v65 = vsub.s32 0, %v64
  %v66 = vrot.slane %v61, %v65
  %68 = vmatprep.subr.mxu0 0.0
  %69 = vmatpush1.msra.mxu0 %v45
  %70 = vmatprep.subr.mxu0 0.0
  %71 = vmatpush1.msra.mxu0 %v46
  %72 = vmatprep.subr.mxu0 0.0
  %73 = vmatpush1.msra.mxu0 %v47
  %74 = vmatprep.subr.mxu0 0.0
  %75 = vmatpush1.msra.mxu0 %v48
  %76 = vmatprep.subr.mxu0 0.0
  %77 = vmatpush1.msra.mxu0 %v49
  %78 = vmatprep.subr.mxu0 0.0
  %79 = vmatpush1.msra.mxu0 %v50
  %80 = vmatprep.subr.mxu0 0.0
  %81 = vmatpush1.msra.mxu0 %v51
  %82 = vmatprep.subr.mxu0 0.0
  %83 = vmatpush1.msra.mxu0 %v52
  %84 = vmatprep.subr.mxu0 0.0
  %85 = vmatpush1.msra.mxu0 %v53
  %86 = vmatprep.subr.mxu0 0.0
  %87 = vmatpush1.msra.mxu0 %v54
  %88 = vmatprep.subr.mxu0 0.0
  %89 = vmatpush1.msra.mxu0 %v55
  %90 = vmatprep.subr.mxu0 0.0
  %91 = vmatpush1.msra.mxu0 %v56
  %92 = vmatprep.subr.mxu0 0.0
  %93 = vmatpush1.msra.mxu0 %v57
  %94 = vmatprep.subr.mxu0 0.0
  %95 = vmatpush1.msra.mxu0 %v58
  %96 = vmatprep.subr.mxu0 0.0
  %97 = vmatpush1.msra.mxu0 %v59
  %98 = vmatprep.subr.mxu0 0.0
  %99 = vmatpush1.msra.mxu0 %v60
  %100 = vmatprep.subr.mxu0 0.0
  %101 = vmatpush1.msra.mxu0 0.0
  %102 = vmatprep.subr.mxu0 0.0
  %103 = vmatpush1.msra.mxu0 0.0
  %104 = vmatprep.subr.mxu0 0.0
  %105 = vmatpush1.msra.mxu0 0.0
  %106 = vmatprep.subr.mxu0 0.0
  %107 = vmatpush1.msra.mxu0 0.0
  %108 = vmatprep.subr.mxu0 0.0
  %109 = vmatpush1.msra.mxu0 0.0
  %110 = vmatprep.subr.mxu0 0.0
  %111 = vmatpush1.msra.mxu0 0.0
  %112 = vmatprep.subr.mxu0 0.0
  %113 = vmatpush1.msra.mxu0 0.0
  %114 = vmatprep.subr.mxu0 0.0
  %115 = vmatpush1.msra.mxu0 0.0
  %116 = vmatprep.subr.mxu0 0.0
  %117 = vmatpush1.msra.mxu0 0.0
  %118 = vmatprep.subr.mxu0 0.0
  %119 = vmatpush1.msra.mxu0 0.0
  %120 = vmatprep.subr.mxu0 0.0
  %121 = vmatpush1.msra.mxu0 0.0
  %122 = vmatprep.subr.mxu0 0.0
  %123 = vmatpush1.msra.mxu0 0.0
  %124 = vmatprep.subr.mxu0 0.0
  %125 = vmatpush1.msra.mxu0 0.0
  %126 = vmatprep.subr.mxu0 0.0
  %127 = vmatpush1.msra.mxu0 0.0
  %128 = vmatprep.subr.mxu0 0.0
  %129 = vmatpush1.msra.mxu0 0.0
  %130 = vmatprep.subr.mxu0 0.0
  %131 = vmatpush1.msra.mxu0 0.0
  %132 = vmatprep.mubr.f32.mxu0 0.0
  %133 = vmatmul.mubr.f32.gmra.mrb[0].mxu0 %v44
  %v134 = vpop.f32.mrb[0].mxu0
  %v135 = vadd.f32 %v66, %v134
  %v136 = vpop.f32.mrb[0].mxu0
  %137 = vdwg.mxu0
  %v138 = vmax.f32 %v135, 0.0
  %v139 = vld [vmem:[%s3] sm:$0xff]
  %v140 = vld [vmem:[%s3 + $0x8] sm:$0xff]
  %v141 = vld [vmem:[%s3 + $0x10] sm:$0xff]
  %v142 = vld [vmem:[%s3 + $0x18] sm:$0xff]
  %v143 = vld [vmem:[%s3 + $0x20] sm:$0xff]
  %v144 = vld [vmem:[%s3 + $0x28] sm:$0xff]
  %v145 = vld [vmem:[%s3 + $0x30] sm:$0xff]
  %v146 = vld [vmem:[%s3 + $0x38] sm:$0xff]
  %v147 = vld [vmem:[%s4] sm:$0x1]
  %v149 = vlaneseq
  %v150 = vshrl.u32 %v149, 7
  %v151 = vsub.s32 0, %v150
  %v152 = vrot.slane %v147, %v151
  %vm154 = vcmask 523264
  %v156 = vsel %vm154, %v138, 0
  %158 = vmatprep.subr.mxu0 0.0
  %159 = vmatpush1.msra.mxu0 %v139
  %160 = vmatprep.subr.mxu0 0.0
  %161 = vmatpush1.msra.mxu0 %v140
  %162 = vmatprep.subr.mxu0 0.0
  %163 = vmatpush1.msra.mxu0 %v141
  %164 = vmatprep.subr.mxu0 0.0
  %165 = vmatpush1.msra.mxu0 %v142
  %166 = vmatprep.subr.mxu0 0.0
  %167 = vmatpush1.msra.mxu0 %v143
  %168 = vmatprep.subr.mxu0 0.0
  %169 = vmatpush1.msra.mxu0 %v144
  %170 = vmatprep.subr.mxu0 0.0
  %171 = vmatpush1.msra.mxu0 %v145
  %172 = vmatprep.subr.mxu0 0.0
  %173 = vmatpush1.msra.mxu0 %v146
  %174 = vmatprep.subr.mxu0 0.0
  %175 = vmatpush1.msra.mxu0 0.0
  %176 = vmatprep.subr.mxu0 0.0
  %177 = vmatpush1.msra.mxu0 0.0
  %178 = vmatprep.subr.mxu0 0.0
  %179 = vmatpush1.msra.mxu0 0.0
  %180 = vmatprep.subr.mxu0 0.0
  %181 = vmatpush1.msra.mxu0 0.0
  %182 = vmatprep.subr.mxu0 0.0
  %183 = vmatpush1.msra.mxu0 0.0
  %184 = vmatprep.subr.mxu0 0.0
  %185 = vmatpush1.msra.mxu0 0.0
  %186 = vmatprep.subr.mxu0 0.0
  %187 = vmatpush1.msra.mxu0 0.0
  %188 = vmatprep.subr.mxu0 0.0
  %189 = vmatpush1.msra.mxu0 0.0
  %190 = vmatprep.subr.mxu0 0.0
  %191 = vmatpush1.msra.mxu0 0.0
  %192 = vmatprep.subr.mxu0 0.0
  %193 = vmatpush1.msra.mxu0 0.0
  %194 = vmatprep.subr.mxu0 0.0
  %195 = vmatpush1.msra.mxu0 0.0
  %196 = vmatprep.subr.mxu0 0.0
  %197 = vmatpush1.msra.mxu0 0.0
  %198 = vmatprep.subr.mxu0 0.0
  %199 = vmatpush1.msra.mxu0 0.0
  %200 = vmatprep.subr.mxu0 0.0
  %201 = vmatpush1.msra.mxu0 0.0
  %202 = vmatprep.subr.mxu0 0.0
  %203 = vmatpush1.msra.mxu0 0.0
  %204 = vmatprep.subr.mxu0 0.0
  %205 = vmatpush1.msra.mxu0 0.0
  %206 = vmatprep.subr.mxu0 0.0
  %207 = vmatpush1.msra.mxu0 0.0
  %208 = vmatprep.subr.mxu0 0.0
  %209 = vmatpush1.msra.mxu0 0.0
  %210 = vmatprep.subr.mxu0 0.0
  %211 = vmatpush1.msra.mxu0 0.0
  %212 = vmatprep.subr.mxu0 0.0
  %213 = vmatpush1.msra.mxu0 0.0
  %214 = vmatprep.subr.mxu0 0.0
  %215 = vmatpush1.msra.mxu0 0.0
  %216 = vmatprep.subr.mxu0 0.0
  %217 = vmatpush1.msra.mxu0 0.0
  %218 = vmatprep.subr.mxu0 0.0
  %219 = vmatpush1.msra.mxu0 0.0
  %220 = vmatprep.subr.mxu0 0.0
  %221 = vmatpush1.msra.mxu0 0.0
  %222 = vmatprep.mubr.f32.mxu0 0.0
  %223 = vmatmul.mubr.f32.gmra.mrb[0].mxu0 %v156
  %v224 = vpop.f32.mrb[0].mxu0
  %v225 = vadd.f32 %v152, %v224
  %v226 = vpop.f32.mrb[0].mxu0
  %227 = vdwg.mxu0
  %v228 = vmax.f32 %v225, 0.0
  %v229 = vld [vmem:[%s5] sm:$0xff]
  %v230 = vld [vmem:[%s5 + $0x8] sm:$0xff]
  %v231 = vld [vmem:[%s5 + $0x10] sm:$0xff]
  %v232 = vld [vmem:[%s5 + $0x18] sm:$0xff]
  %v233 = vld [vmem:[%s6] sm:$0x1]
  %v235 = vlaneseq
  %v236 = vshrl.u32 %v235, 7
  %v237 = vsub.s32 0, %v236
  %v238 = vrot.slane %v233, %v237
  %vm240 = vcmask 261120
  %v242 = vsel %vm240, %v228, 0
  %244 = vmatprep.subr.mxu0 0.0
  %245 = vmatpush1.msra.mxu0 %v229
  %246 = vmatprep.subr.mxu0 0.0
  %247 = vmatpush1.msra.mxu0 %v230
  %248 = vmatprep.subr.mxu0 0.0
  %249 = vmatpush1.msra.mxu0 %v231
  %250 = vmatprep.subr.mxu0 0.0
  %251 = vmatpush1.msra.mxu0 %v232
  %252 = vmatprep.subr.mxu0 0.0
  %253 = vmatpush1.msra.mxu0 0.0
  %254 = vmatprep.subr.mxu0 0.0
  %255 = vmatpush1.msra.mxu0 0.0
  %256 = vmatprep.subr.mxu0 0.0
  %257 = vmatpush1.msra.mxu0 0.0
  %258 = vmatprep.subr.mxu0 0.0
  %259 = vmatpush1.msra.mxu0 0.0
  %260 = vmatprep.subr.mxu0 0.0
  %261 = vmatpush1.msra.mxu0 0.0
  %262 = vmatprep.subr.mxu0 0.0
  %263 = vmatpush1.msra.mxu0 0.0
  %264 = vmatprep.subr.mxu0 0.0
  %265 = vmatpush1.msra.mxu0 0.0
  %266 = vmatprep.subr.mxu0 0.0
  %267 = vmatpush1.msra.mxu0 0.0
  %268 = vmatprep.subr.mxu0 0.0
  %269 = vmatpush1.msra.mxu0 0.0
  %270 = vmatprep.subr.mxu0 0.0
  %271 = vmatpush1.msra.mxu0 0.0
  %272 = vmatprep.subr.mxu0 0.0
  %273 = vmatpush1.msra.mxu0 0.0
  %274 = vmatprep.subr.mxu0 0.0
  %275 = vmatpush1.msra.mxu0 0.0
  %276 = vmatprep.subr.mxu0 0.0
  %277 = vmatpush1.msra.mxu0 0.0
  %278 = vmatprep.subr.mxu0 0.0
  %279 = vmatpush1.msra.mxu0 0.0
  %280 = vmatprep.subr.mxu0 0.0
  %281 = vmatpush1.msra.mxu0 0.0
  %282 = vmatprep.subr.mxu0 0.0
  %283 = vmatpush1.msra.mxu0 0.0
  %284 = vmatprep.subr.mxu0 0.0
  %285 = vmatpush1.msra.mxu0 0.0
  %286 = vmatprep.subr.mxu0 0.0
  %287 = vmatpush1.msra.mxu0 0.0
  %288 = vmatprep.subr.mxu0 0.0
  %289 = vmatpush1.msra.mxu0 0.0
  %290 = vmatprep.subr.mxu0 0.0
  %291 = vmatpush1.msra.mxu0 0.0
  %292 = vmatprep.subr.mxu0 0.0
  %293 = vmatpush1.msra.mxu0 0.0
  %294 = vmatprep.subr.mxu0 0.0
  %295 = vmatpush1.msra.mxu0 0.0
  %296 = vmatprep.subr.mxu0 0.0
  %297 = vmatpush1.msra.mxu0 0.0
  %298 = vmatprep.subr.mxu0 0.0
  %299 = vmatpush1.msra.mxu0 0.0
  %300 = vmatprep.subr.mxu0 0.0
  %301 = vmatpush1.msra.mxu0 0.0
  %302 = vmatprep.subr.mxu0 0.0
  %303 = vmatpush1.msra.mxu0 0.0
  %304 = vmatprep.subr.mxu0 0.0
  %305 = vmatpush1.msra.mxu0 0.0
  %306 = vmatprep.subr.mxu0 0.0
  %307 = vmatpush1.msra.mxu0 0.0
  %308 = vmatprep.mubr.f32.mxu0 0.0
  %309 = vmatmul.mubr.f32.gmra.mrb[0].mxu0 %v242
  %v310 = vpop.f32.mrb[0].mxu0
  %v311 = vadd.f32 %v238, %v310
  %v312 = vpop.f32.mrb[0].mxu0
  %313 = vdwg.mxu0
  %v314 = vmax.f32 %v311, 0.0
  %v315 = vld [vmem:[%s7] sm:$0xff]
  %v316 = vld [vmem:[%s7 + $0x8] sm:$0xff]
  %v317 = vld [vmem:[%s8] sm:$0x1]
  %v319 = vlaneseq
  %v320 = vshrl.u32 %v319, 7
  %v321 = vsub.s32 0, %v320
  %v322 = vrot.slane %v317, %v321
  %vm324 = vcmask 130048
  %v326 = vsel %vm324, %v314, 0
  %328 = vmatprep.subr.mxu0 0.0
  %329 = vmatpush1.msra.mxu0 %v315
  %330 = vmatprep.subr.mxu0 0.0
  %331 = vmatpush1.msra.mxu0 %v316
  %332 = vmatprep.subr.mxu0 0.0
  %333 = vmatpush1.msra.mxu0 0.0
  %334 = vmatprep.subr.mxu0 0.0
  %335 = vmatpush1.msra.mxu0 0.0
  %336 = vmatprep.subr.mxu0 0.0
  %337 = vmatpush1.msra.mxu0 0.0
  %338 = vmatprep.subr.mxu0 0.0
  %339 = vmatpush1.msra.mxu0 0.0
  %340 = vmatprep.subr.mxu0 0.0
  %341 = vmatpush1.msra.mxu0 0.0
  %342 = vmatprep.subr.mxu0 0.0
  %343 = vmatpush1.msra.mxu0 0.0
  %344 = vmatprep.subr.mxu0 0.0
  %345 = vmatpush1.msra.mxu0 0.0
  %346 = vmatprep.subr.mxu0 0.0
  %347 = vmatpush1.msra.mxu0 0.0
  %348 = vmatprep.subr.mxu0 0.0
  %349 = vmatpush1.msra.mxu0 0.0
  %350 = vmatprep.subr.mxu0 0.0
  %351 = vmatpush1.msra.mxu0 0.0
  %352 = vmatprep.subr.mxu0 0.0
  %353 = vmatpush1.msra.mxu0 0.0
  %354 = vmatprep.subr.mxu0 0.0
  %355 = vmatpush1.msra.mxu0 0.0
  %356 = vmatprep.subr.mxu0 0.0
  %357 = vmatpush1.msra.mxu0 0.0
  %358 = vmatprep.subr.mxu0 0.0
  %359 = vmatpush1.msra.mxu0 0.0
  %360 = vmatprep.subr.mxu0 0.0
  %361 = vmatpush1.msra.mxu0 0.0
  %362 = vmatprep.subr.mxu0 0.0
  %363 = vmatpush1.msra.mxu0 0.0
  %364 = vmatprep.subr.mxu0 0.0
  %365 = vmatpush1.msra.mxu0 0.0
  %366 = vmatprep.subr.mxu0 0.0
  %367 = vmatpush1.msra.mxu0 0.0
  %368 = vmatprep.subr.mxu0 0.0
  %369 = vmatpush1.msra.mxu0 0.0
  %370 = vmatprep.subr.mxu0 0.0
  %371 = vmatpush1.msra.mxu0 0.0
  %372 = vmatprep.subr.mxu0 0.0
  %373 = vmatpush1.msra.mxu0 0.0
  %374 = vmatprep.subr.mxu0 0.0
  %375 = vmatpush1.msra.mxu0 0.0
  %376 = vmatprep.subr.mxu0 0.0
  %377 = vmatpush1.msra.mxu0 0.0
  %378 = vmatprep.subr.mxu0 0.0
  %379 = vmatpush1.msra.mxu0 0.0
  %380 = vmatprep.subr.mxu0 0.0
  %381 = vmatpush1.msra.mxu0 0.0
  %382 = vmatprep.subr.mxu0 0.0
  %383 = vmatpush1.msra.mxu0 0.0
  %384 = vmatprep.subr.mxu0 0.0
  %385 = vmatpush1.msra.mxu0 0.0
  %386 = vmatprep.subr.mxu0 0.0
  %387 = vmatpush1.msra.mxu0 0.0
  %388 = vmatprep.subr.mxu0 0.0
  %389 = vmatpush1.msra.mxu0 0.0
  %390 = vmatprep.subr.mxu0 0.0
  %391 = vmatpush1.msra.mxu0 0.0
  %392 = vmatprep.mubr.f32.mxu0 0.0
  %393 = vmatmul.mubr.f32.gmra.mrb[0].mxu0 %v326
  %v394 = vpop.f32.mrb[0].mxu0
  %v395 = vadd.f32 %v322, %v394
  %v396 = vpop.f32.mrb[0].mxu0
  %397 = vdwg.mxu0
  %v398 = vmax.f32 %v395, 0.0
  %v399 = vld [vmem:[%s9] sm:$0xff]
  %v400 = vld [vmem:[%s10] sm:$0x1]
  %v402 = vlaneseq
  %v403 = vshrl.u32 %v402, 7
  %v404 = vsub.s32 0, %v403
  %v405 = vrot.slane %v400, %v404
  %vm407 = vcmask 64512
  %v409 = vsel %vm407, %v398, 0
  %411 = vmatprep.subr.mxu0 0.0
  %412 = vmatpush1.msra.mxu0 %v399
  %413 = vmatprep.subr.mxu0 0.0
  %414 = vmatpush1.msra.mxu0 0.0
  %415 = vmatprep.subr.mxu0 0.0
  %416 = vmatpush1.msra.mxu0 0.0
  %417 = vmatprep.subr.mxu0 0.0
  %418 = vmatpush1.msra.mxu0 0.0
  %419 = vmatprep.subr.mxu0 0.0
  %420 = vmatpush1.msra.mxu0 0.0
  %421 = vmatprep.subr.mxu0 0.0
  %422 = vmatpush1.msra.mxu0 0.0
  %423 = vmatprep.subr.mxu0 0.0
  %424 = vmatpush1.msra.mxu0 0.0
  %425 = vmatprep.subr.mxu0 0.0
  %426 = vmatpush1.msra.mxu0 0.0
  %427 = vmatprep.subr.mxu0 0.0
  %428 = vmatpush1.msra.mxu0 0.0
  %429 = vmatprep.subr.mxu0 0.0
  %430 = vmatpush1.msra.mxu0 0.0
  %431 = vmatprep.subr.mxu0 0.0
  %432 = vmatpush1.msra.mxu0 0.0
  %433 = vmatprep.subr.mxu0 0.0
  %434 = vmatpush1.msra.mxu0 0.0
  %435 = vmatprep.subr.mxu0 0.0
  %436 = vmatpush1.msra.mxu0 0.0
  %437 = vmatprep.subr.mxu0 0.0
  %438 = vmatpush1.msra.mxu0 0.0
  %439 = vmatprep.subr.mxu0 0.0
  %440 = vmatpush1.msra.mxu0 0.0
  %441 = vmatprep.subr.mxu0 0.0
  %442 = vmatpush1.msra.mxu0 0.0
  %443 = vmatprep.subr.mxu0 0.0
  %444 = vmatpush1.msra.mxu0 0.0
  %445 = vmatprep.subr.mxu0 0.0
  %446 = vmatpush1.msra.mxu0 0.0
  %447 = vmatprep.subr.mxu0 0.0
  %448 = vmatpush1.msra.mxu0 0.0
  %449 = vmatprep.subr.mxu0 0.0
  %450 = vmatpush1.msra.mxu0 0.0
  %451 = vmatprep.subr.mxu0 0.0
  %452 = vmatpush1.msra.mxu0 0.0
  %453 = vmatprep.subr.mxu0 0.0
  %454 = vmatpush1.msra.mxu0 0.0
  %455 = vmatprep.subr.mxu0 0.0
  %456 = vmatpush1.msra.mxu0 0.0
  %457 = vmatprep.subr.mxu0 0.0
  %458 = vmatpush1.msra.mxu0 0.0
  %459 = vmatprep.subr.mxu0 0.0
  %460 = vmatpush1.msra.mxu0 0.0
  %461 = vmatprep.subr.mxu0 0.0
  %462 = vmatpush1.msra.mxu0 0.0
  %463 = vmatprep.subr.mxu0 0.0
  %464 = vmatpush1.msra.mxu0 0.0
  %465 = vmatprep.subr.mxu0 0.0
  %466 = vmatpush1.msra.mxu0 0.0
  %467 = vmatprep.subr.mxu0 0.0
  %468 = vmatpush1.msra.mxu0 0.0
  %469 = vmatprep.subr.mxu0 0.0
  %470 = vmatpush1.msra.mxu0 0.0
  %471 = vmatprep.subr.mxu0 0.0
  %472 = vmatpush1.msra.mxu0 0.0
  %473 = vmatprep.subr.mxu0 0.0
  %474 = vmatpush1.msra.mxu0 0.0
  %475 = vmatprep.mubr.f32.mxu0 0.0
  %476 = vmatmul.mubr.f32.gmra.mrb[0].mxu0 %v409
  %v477 = vpop.f32.mrb[0].mxu0
  %v478 = vadd.f32 %v405, %v477
  %v479 = vpop.f32.mrb[0].mxu0
  %480 = vdwg.mxu0
  %v481 = vmax.f32 %v478, 0.0
  %v482 = vld [vmem:[%s11] sm:$0xf]
  %v483 = vld [vmem:[%s12] sm:$0x1]
  %v485 = vlaneseq
  %v486 = vshrl.u32 %v485, 7
  %v487 = vsub.s32 0, %v486
  %v488 = vrot.slane %v483, %v487
  %vm490 = vcmask 31744
  %v492 = vsel %vm490, %v481, 0
  %vm494 = vcmask 1043456
  %v496 = vsel %vm494, %v482, 0
  %498 = vmatprep.subr.mxu0 0.0
  %499 = vmatpush1.msra.mxu0 %v496
  %500 = vmatprep.subr.mxu0 0.0
  %501 = vmatpush1.msra.mxu0 0.0
  %502 = vmatprep.subr.mxu0 0.0
  %503 = vmatpush1.msra.mxu0 0.0
  %504 = vmatprep.subr.mxu0 0.0
  %505 = vmatpush1.msra.mxu0 0.0
  %506 = vmatprep.subr.mxu0 0.0
  %507 = vmatpush1.msra.mxu0 0.0
  %508 = vmatprep.subr.mxu0 0.0
  %509 = vmatpush1.msra.mxu0 0.0
  %510 = vmatprep.subr.mxu0 0.0
  %511 = vmatpush1.msra.mxu0 0.0
  %512 = vmatprep.subr.mxu0 0.0
  %513 = vmatpush1.msra.mxu0 0.0
  %514 = vmatprep.subr.mxu0 0.0
  %515 = vmatpush1.msra.mxu0 0.0
  %516 = vmatprep.subr.mxu0 0.0
  %517 = vmatpush1.msra.mxu0 0.0
  %518 = vmatprep.subr.mxu0 0.0
  %519 = vmatpush1.msra.mxu0 0.0
  %520 = vmatprep.subr.mxu0 0.0
  %521 = vmatpush1.msra.mxu0 0.0
  %522 = vmatprep.subr.mxu0 0.0
  %523 = vmatpush1.msra.mxu0 0.0
  %524 = vmatprep.subr.mxu0 0.0
  %525 = vmatpush1.msra.mxu0 0.0
  %526 = vmatprep.subr.mxu0 0.0
  %527 = vmatpush1.msra.mxu0 0.0
  %528 = vmatprep.subr.mxu0 0.0
  %529 = vmatpush1.msra.mxu0 0.0
  %530 = vmatprep.subr.mxu0 0.0
  %531 = vmatpush1.msra.mxu0 0.0
  %532 = vmatprep.subr.mxu0 0.0
  %533 = vmatpush1.msra.mxu0 0.0
  %534 = vmatprep.subr.mxu0 0.0
  %535 = vmatpush1.msra.mxu0 0.0
  %536 = vmatprep.subr.mxu0 0.0
  %537 = vmatpush1.msra.mxu0 0.0
  %538 = vmatprep.subr.mxu0 0.0
  %539 = vmatpush1.msra.mxu0 0.0
  %540 = vmatprep.subr.mxu0 0.0
  %541 = vmatpush1.msra.mxu0 0.0
  %542 = vmatprep.subr.mxu0 0.0
  %543 = vmatpush1.msra.mxu0 0.0
  %544 = vmatprep.subr.mxu0 0.0
  %545 = vmatpush1.msra.mxu0 0.0
  %546 = vmatprep.subr.mxu0 0.0
  %547 = vmatpush1.msra.mxu0 0.0
  %548 = vmatprep.subr.mxu0 0.0
  %549 = vmatpush1.msra.mxu0 0.0
  %550 = vmatprep.subr.mxu0 0.0
  %551 = vmatpush1.msra.mxu0 0.0
  %552 = vmatprep.subr.mxu0 0.0
  %553 = vmatpush1.msra.mxu0 0.0
  %554 = vmatprep.subr.mxu0 0.0
  %555 = vmatpush1.msra.mxu0 0.0
  %556 = vmatprep.subr.mxu0 0.0
  %557 = vmatpush1.msra.mxu0 0.0
  %558 = vmatprep.subr.mxu0 0.0
  %559 = vmatpush1.msra.mxu0 0.0
  %560 = vmatprep.subr.mxu0 0.0
  %561 = vmatpush1.msra.mxu0 0.0
  %562 = vmatprep.mubr.f32.mxu0 0.0
  %563 = vmatmul.mubr.f32.gmra.mrb[0].mxu0 %v492
  %v564 = vpop.f32.mrb[0].mxu0
  %v565 = vadd.f32 %v488, %v564
  %v566 = vpop.f32.mrb[0].mxu0
  %567 = vdwg.mxu0
  %vm568 = vcmask 15360
  %569 = vst.msk [vmem:[%s13] sm:$0xff] %vm568, %v565
  // Predicated region
  $region54: #{mlp_forward.1} parent=0 // pred_check
    _
  $region55: #{mlp_forward.1} parent=0 // pred_check_branch
    %571 = sbr.rel (0) target = $region57
  $region56: #{mlp_forward.1} parent=0 // pred_region
    _
  $region57: #{mlp_forward.1} parent=0 // pred_fallthru
    _
  // Predicated region
  $region58: #{mlp_forward.1} parent=0 // pred_check
    _
  $region59: #{mlp_forward.1} parent=0 // pred_check_branch
    %573 = sbr.rel (0) target = $region61
  $region60: #{mlp_forward.1} parent=0 // pred_region
    _
  $region61: #{mlp_forward.1} parent=0 // pred_fallthru
    _

</llo_original>
